<compile_context>
chip_gen: v5e
topology: v5e:2x2
jax: 0.10.0
libtpu: 0.0.40
codegen_flags: <defaults>
</compile_context>

<pallas_src>
import functools

import numpy as np
import jax
import jax.numpy as jnp
from jax.experimental import pallas as pl
from jax.experimental.pallas import tpu as pltpu


def _formula_kernel(big_ref, x_ref, inv_ref, out_ref, *, num_terms, block_len):
    """big_ref: VMEM (num_terms*2L, P1*L) fused attn (x) forward-DFT matrix.
    x_ref:   VMEM (P1*L, TM) panel data, columns = batch*blocks (lanes).
    inv_ref: VMEM (L, 2L) inverse-DFT-real matrix (1/L folded in).
    out_ref: VMEM (L, TM)."""
    L = block_len
    two_l = 2 * L

    # One MXU matmul -> per term t: rows [t*2L, t*2L+L) = Re(DFT(wcomb_t)),
    #                               rows [t*2L+L, (t+1)*2L) = Im(DFT(wcomb_t)).
    z = jnp.dot(big_ref[...], x_ref[...], preferred_element_type=jnp.float32)

    def chain(start, count):
        # frequency-domain left-fold of block_binding2 (circular convolution = complex product)
        re = z[start * two_l:start * two_l + L, :]
        im = z[start * two_l + L:(start + 1) * two_l, :]
        for t in range(start + 1, start + count):
            wr = z[t * two_l:t * two_l + L, :]
            wi = z[t * two_l + L:(t + 1) * two_l, :]
            re, im = re * wr - im * wi, re * wi + im * wr
        return re, im

    half = num_terms // 2
    nr, ni = chain(0, half)
    dr, di = chain(half, num_terms - half)

    # block_unbinding2: N * conj(D), then real part of inverse DFT (single fused matmul).
    xr = nr * dr + ni * di
    xi = ni * dr - nr * di
    freq = jnp.concatenate([xr, xi], axis=0)                       # (2L, TM)
    out_ref[...] = jnp.dot(inv_ref[...], freq, preferred_element_type=jnp.float32)


def extended_general_learnable_formula(x, ctx, terms, *, k, temperature=1.0):
    """x: (B, examples_len, D), ctx: (B, context_len, D), terms: (12, P1). D = k * L."""
    B = x.shape[0]
    xc = jnp.concatenate([x, ctx], axis=1)                          # (B, P, D)
    P, D = xc.shape[1], xc.shape[2]
    L = D // k
    xb = xc.reshape(B, P, k, L)
    ident = jnp.zeros((B, 1, k, L), xc.dtype).at[..., 0].set(1.0)   # add_identity
    xb = jnp.concatenate([xb, ident], axis=1)                       # (B, P1, k, L)
    P1 = P + 1
    M = B * k
    num_terms = int(terms.shape[0])

    # Lane-dense layout: rows = panel*L + l (sublanes), cols = b*k + j (lanes).
    x_pl = jnp.transpose(xb, (1, 3, 0, 2)).reshape(P1 * L, M).astype(jnp.float32)

    # Pad the lane dimension to a multiple of 128: unmasked vld/vst everywhere and uniform
    # 128-multiple tiles.  Padded columns are zeros and are sliced off after the kernel.
    Mp = ((M + 127) // 128) * 128
    if Mp != M:
        x_pl = jnp.pad(x_pl, ((0, 0), (0, Mp - M)))

    # Parameter preprocessing (O(1), independent of batch size).
    attn = jax.nn.softmax(terms.astype(jnp.float32) / temperature, axis=-1)   # (12, P1)
    idx = np.arange(L)
    ang = 2.0 * np.pi * np.outer(idx, idx) / L
    cos_m = np.cos(ang).astype(np.float32)
    sin_m = np.sin(ang).astype(np.float32)
    fwd_t = jnp.asarray(np.concatenate([cos_m, -sin_m], axis=0))              # (2L, L)
    inv_m = jnp.asarray(np.concatenate([cos_m, -sin_m], axis=1) / L)          # (L, 2L)
    # Fused "attention-weighted combination + forward DFT" matrix: (12*2L, P1*L).
    big = jnp.einsum('tp,fl->tfpl', attn, fwd_t).reshape(num_terms * 2 * L, P1 * L)

    # Tile the (padded) lane dimension; biggest tile that divides keeps per-step overhead low.
    TM = 128
    for cand in (2048, 1024, 512, 256, 128):
        if Mp % cand == 0:
            TM = cand
            break
    grid = (Mp // TM,)

    kernel = functools.partial(_formula_kernel, num_terms=num_terms, block_len=L)

    out_lm = pl.pallas_call(
        kernel,
        out_shape=jax.ShapeDtypeStruct((L, Mp), jnp.float32),
        grid=grid,
        in_specs=[
            pl.BlockSpec((num_terms * 2 * L, P1 * L), lambda i: (0, 0)),  # fused weights
            pl.BlockSpec((P1 * L, TM), lambda i: (0, i)),                 # panel data tile
            pl.BlockSpec((L, 2 * L), lambda i: (0, 0)),                   # inverse DFT matrix
        ],
        out_specs=pl.BlockSpec((L, TM), lambda i: (0, i)),
        compiler_params=pltpu.CompilerParams(dimension_semantics=("parallel",)),
    )(big, x_pl, inv_m)

    # (L, Mp) -> drop padding -> (B, k, L) -> (B, k*L)   == output.view(B, -1)
    out = jnp.transpose(out_lm[:, :M].reshape(L, B, k), (1, 2, 0)).reshape(B, k * L)
    return out


def reference_forward(x, ctx, terms, *, k, temperature=1.0):
    """Pure-JAX reference mirroring the PyTorch forward (FFT-based block (un)binding)."""
    B = x.shape[0]
    xc = jnp.concatenate([x, ctx], axis=1)
    P, D = xc.shape[1], xc.shape[2]
    L = D // k
    xb = xc.reshape(B, P, k, L)
    ident = jnp.zeros((B, 1, k, L), xc.dtype).at[..., 0].set(1.0)
    xb = jnp.concatenate([xb, ident], axis=1)
    xf = xb.reshape(B, P + 1, D)
    attn = jax.nn.softmax(terms / temperature, axis=-1)

    def wcomb(w):
        return jnp.einsum('p,bpd->bd', w, xf).reshape(B, k, L)

    def bind(a, b):
        return jnp.real(jnp.fft.ifft(jnp.fft.fft(a, axis=-1) * jnp.fft.fft(b, axis=-1), axis=-1))

    def unbind(n, d):
        return jnp.real(jnp.fft.ifft(jnp.fft.fft(n, axis=-1)
                                     * jnp.conj(jnp.fft.fft(d, axis=-1)), axis=-1))

    half = terms.shape[0] // 2
    num = wcomb(attn[0])
    for t in range(1, half):
        num = bind(num, wcomb(attn[t]))
    den = wcomb(attn[half])
    for t in range(half + 1, terms.shape[0]):
        den = bind(den, wcomb(attn[t]))
    return unbind(num, den).reshape(B, -1)


if __name__ == "__main__":
    # Module config: examples_len + context_len + 1 = 8 panels (matches program_weights' zeros(8))
    examples_len, context_len, k = 5, 2, 4
    B, L = 2, 8
    D = k * L                                   # feature dim per panel = 32
    P1 = examples_len + context_len + 1         # 8 panels incl. identity

    key = jax.random.PRNGKey(0)
    kx, kc, kt = jax.random.split(key, 3)
    x = jax.random.normal(kx, (B, examples_len, D), dtype=jnp.float32)
    ctx = jax.random.normal(kc, (B, context_len, D), dtype=jnp.float32)
    # init_terms(12, P1): 12 parameters, each t.randn(num_panels)
    terms = jax.random.normal(kt, (12, P1), dtype=jnp.float32)

    fwd = jax.jit(functools.partial(extended_general_learnable_formula, k=k))
    out = fwd(x, ctx, terms)
    out = jax.block_until_ready(out)

    ref = reference_forward(x, ctx, terms, k=k)
    # Default-precision MXU passes (no Precision.HIGHEST) vs. an XLA FFT reference:
    # slightly looser tolerance than exact-f32, still well within the chained-product noise.
    np.testing.assert_allclose(np.asarray(out), np.asarray(ref), rtol=2e-2, atol=2e-2)

    print("KERNEL_OK")
</pallas_src>

<mosaic_0001>
module attributes {stable_mosaic.version = 11 : i64} {
  func.func @_formula_kernel(%arg0: i32, %arg1: memref<192x64xf32, #tpu.memory_space<vmem>>, %arg2: memref<64x128xf32, #tpu.memory_space<vmem>>, %arg3: memref<8x16xf32, #tpu.memory_space<vmem>>, %arg4: memref<8x128xf32, #tpu.memory_space<vmem>>) attributes {dimension_semantics = [#tpu.dimension_semantics<parallel>], iteration_bounds = array<i64: 1>, scalar_prefetch = 0 : i64, scratch_operands = 0 : i64, tpu.core_type = #tpu.core_type<tc>, window_params = [{pipeline_mode = #tpu.pipeline_mode<synchronous>, transform_indices = @transform_0, window_bounds = array<i64: 192, 64>}, {transform_indices = @transform_1, window_bounds = array<i64: 64, 128>}, {pipeline_mode = #tpu.pipeline_mode<synchronous>, transform_indices = @transform_2, window_bounds = array<i64: 8, 16>}, {transform_indices = @transform_3, window_bounds = array<i64: 8, 128>}]} {
    %c0 = arith.constant 0 : index
    %c0_0 = arith.constant 0 : index
    %0 = vector.load %arg1[%c0, %c0_0] : memref<192x64xf32, #tpu.memory_space<vmem>>, vector<192x64xf32>
    %c0_1 = arith.constant 0 : index
    %c0_2 = arith.constant 0 : index
    %1 = vector.load %arg2[%c0_1, %c0_2] : memref<64x128xf32, #tpu.memory_space<vmem>>, vector<64x128xf32>
    %cst = arith.constant dense<0.000000e+00> : vector<192x128xf32>
    %2 = tpu.matmul %0, %1, %cst {dimension_numbers = #tpu.dot_dimension_numbers<[1], [0], [0], [1], [0, 0, 1, 1], [], []>} : vector<192x64xf32>, vector<64x128xf32>, vector<192x128xf32> -> vector<192x128xf32>
    %3 = vector.extract_strided_slice %2 {offsets = [0, 0], sizes = [8, 128], strides = [1, 1]} : vector<192x128xf32> to vector<8x128xf32>
    %4 = vector.extract_strided_slice %2 {offsets = [8, 0], sizes = [8, 128], strides = [1, 1]} : vector<192x128xf32> to vector<8x128xf32>
    %5 = vector.extract_strided_slice %2 {offsets = [16, 0], sizes = [8, 128], strides = [1, 1]} : vector<192x128xf32> to vector<8x128xf32>
    %6 = vector.extract_strided_slice %2 {offsets = [24, 0], sizes = [8, 128], strides = [1, 1]} : vector<192x128xf32> to vector<8x128xf32>
    %7 = arith.mulf %3, %5 : vector<8x128xf32>
    %8 = arith.mulf %4, %6 : vector<8x128xf32>
    %9 = arith.subf %7, %8 : vector<8x128xf32>
    %10 = arith.mulf %3, %6 : vector<8x128xf32>
    %11 = arith.mulf %4, %5 : vector<8x128xf32>
    %12 = arith.addf %10, %11 : vector<8x128xf32>
    %13 = vector.extract_strided_slice %2 {offsets = [32, 0], sizes = [8, 128], strides = [1, 1]} : vector<192x128xf32> to vector<8x128xf32>
    %14 = vector.extract_strided_slice %2 {offsets = [40, 0], sizes = [8, 128], strides = [1, 1]} : vector<192x128xf32> to vector<8x128xf32>
    %15 = arith.mulf %9, %13 : vector<8x128xf32>
    %16 = arith.mulf %12, %14 : vector<8x128xf32>
    %17 = arith.subf %15, %16 : vector<8x128xf32>
    %18 = arith.mulf %9, %14 : vector<8x128xf32>
    %19 = arith.mulf %12, %13 : vector<8x128xf32>
    %20 = arith.addf %18, %19 : vector<8x128xf32>
    %21 = vector.extract_strided_slice %2 {offsets = [48, 0], sizes = [8, 128], strides = [1, 1]} : vector<192x128xf32> to vector<8x128xf32>
    %22 = vector.extract_strided_slice %2 {offsets = [56, 0], sizes = [8, 128], strides = [1, 1]} : vector<192x128xf32> to vector<8x128xf32>
    %23 = arith.mulf %17, %21 : vector<8x128xf32>
    %24 = arith.mulf %20, %22 : vector<8x128xf32>
    %25 = arith.subf %23, %24 : vector<8x128xf32>
    %26 = arith.mulf %17, %22 : vector<8x128xf32>
    %27 = arith.mulf %20, %21 : vector<8x128xf32>
    %28 = arith.addf %26, %27 : vector<8x128xf32>
    %29 = vector.extract_strided_slice %2 {offsets = [64, 0], sizes = [8, 128], strides = [1, 1]} : vector<192x128xf32> to vector<8x128xf32>
    %30 = vector.extract_strided_slice %2 {offsets = [72, 0], sizes = [8, 128], strides = [1, 1]} : vector<192x128xf32> to vector<8x128xf32>
    %31 = arith.mulf %25, %29 : vector<8x128xf32>
    %32 = arith.mulf %28, %30 : vector<8x128xf32>
    %33 = arith.subf %31, %32 : vector<8x128xf32>
    %34 = arith.mulf %25, %30 : vector<8x128xf32>
    %35 = arith.mulf %28, %29 : vector<8x128xf32>
    %36 = arith.addf %34, %35 : vector<8x128xf32>
    %37 = vector.extract_strided_slice %2 {offsets = [80, 0], sizes = [8, 128], strides = [1, 1]} : vector<192x128xf32> to vector<8x128xf32>
    %38 = vector.extract_strided_slice %2 {offsets = [88, 0], sizes = [8, 128], strides = [1, 1]} : vector<192x128xf32> to vector<8x128xf32>
    %39 = arith.mulf %33, %37 : vector<8x128xf32>
    %40 = arith.mulf %36, %38 : vector<8x128xf32>
    %41 = arith.subf %39, %40 : vector<8x128xf32>
    %42 = arith.mulf %33, %38 : vector<8x128xf32>
    %43 = arith.mulf %36, %37 : vector<8x128xf32>
    %44 = arith.addf %42, %43 : vector<8x128xf32>
    %45 = vector.extract_strided_slice %2 {offsets = [96, 0], sizes = [8, 128], strides = [1, 1]} : vector<192x128xf32> to vector<8x128xf32>
    %46 = vector.extract_strided_slice %2 {offsets = [104, 0], sizes = [8, 128], strides = [1, 1]} : vector<192x128xf32> to vector<8x128xf32>
    %47 = vector.extract_strided_slice %2 {offsets = [112, 0], sizes = [8, 128], strides = [1, 1]} : vector<192x128xf32> to vector<8x128xf32>
    %48 = vector.extract_strided_slice %2 {offsets = [120, 0], sizes = [8, 128], strides = [1, 1]} : vector<192x128xf32> to vector<8x128xf32>
    %49 = arith.mulf %45, %47 : vector<8x128xf32>
    %50 = arith.mulf %46, %48 : vector<8x128xf32>
    %51 = arith.subf %49, %50 : vector<8x128xf32>
    %52 = arith.mulf %45, %48 : vector<8x128xf32>
    %53 = arith.mulf %46, %47 : vector<8x128xf32>
    %54 = arith.addf %52, %53 : vector<8x128xf32>
    %55 = vector.extract_strided_slice %2 {offsets = [128, 0], sizes = [8, 128], strides = [1, 1]} : vector<192x128xf32> to vector<8x128xf32>
    %56 = vector.extract_strided_slice %2 {offsets = [136, 0], sizes = [8, 128], strides = [1, 1]} : vector<192x128xf32> to vector<8x128xf32>
    %57 = arith.mulf %51, %55 : vector<8x128xf32>
    %58 = arith.mulf %54, %56 : vector<8x128xf32>
    %59 = arith.subf %57, %58 : vector<8x128xf32>
    %60 = arith.mulf %51, %56 : vector<8x128xf32>
    %61 = arith.mulf %54, %55 : vector<8x128xf32>
    %62 = arith.addf %60, %61 : vector<8x128xf32>
    %63 = vector.extract_strided_slice %2 {offsets = [144, 0], sizes = [8, 128], strides = [1, 1]} : vector<192x128xf32> to vector<8x128xf32>
    %64 = vector.extract_strided_slice %2 {offsets = [152, 0], sizes = [8, 128], strides = [1, 1]} : vector<192x128xf32> to vector<8x128xf32>
    %65 = arith.mulf %59, %63 : vector<8x128xf32>
    %66 = arith.mulf %62, %64 : vector<8x128xf32>
    %67 = arith.subf %65, %66 : vector<8x128xf32>
    %68 = arith.mulf %59, %64 : vector<8x128xf32>
    %69 = arith.mulf %62, %63 : vector<8x128xf32>
    %70 = arith.addf %68, %69 : vector<8x128xf32>
    %71 = vector.extract_strided_slice %2 {offsets = [160, 0], sizes = [8, 128], strides = [1, 1]} : vector<192x128xf32> to vector<8x128xf32>
    %72 = vector.extract_strided_slice %2 {offsets = [168, 0], sizes = [8, 128], strides = [1, 1]} : vector<192x128xf32> to vector<8x128xf32>
    %73 = arith.mulf %67, %71 : vector<8x128xf32>
    %74 = arith.mulf %70, %72 : vector<8x128xf32>
    %75 = arith.subf %73, %74 : vector<8x128xf32>
    %76 = arith.mulf %67, %72 : vector<8x128xf32>
    %77 = arith.mulf %70, %71 : vector<8x128xf32>
    %78 = arith.addf %76, %77 : vector<8x128xf32>
    %79 = vector.extract_strided_slice %2 {offsets = [176, 0], sizes = [8, 128], strides = [1, 1]} : vector<192x128xf32> to vector<8x128xf32>
    %80 = vector.extract_strided_slice %2 {offsets = [184, 0], sizes = [8, 128], strides = [1, 1]} : vector<192x128xf32> to vector<8x128xf32>
    %81 = arith.mulf %75, %79 : vector<8x128xf32>
    %82 = arith.mulf %78, %80 : vector<8x128xf32>
    %83 = arith.subf %81, %82 : vector<8x128xf32>
    %84 = arith.mulf %75, %80 : vector<8x128xf32>
    %85 = arith.mulf %78, %79 : vector<8x128xf32>
    %86 = arith.addf %84, %85 : vector<8x128xf32>
    %87 = arith.mulf %41, %83 : vector<8x128xf32>
    %88 = arith.mulf %44, %86 : vector<8x128xf32>
    %89 = arith.addf %87, %88 : vector<8x128xf32>
    %90 = arith.mulf %44, %83 : vector<8x128xf32>
    %91 = arith.mulf %41, %86 : vector<8x128xf32>
    %92 = arith.subf %90, %91 : vector<8x128xf32>
    %93 = tpu.concatenate %89, %92 in 0 : vector<8x128xf32>, vector<8x128xf32> -> vector<16x128xf32>
    %c0_3 = arith.constant 0 : index
    %c0_4 = arith.constant 0 : index
    %94 = vector.load %arg3[%c0_3, %c0_4] : memref<8x16xf32, #tpu.memory_space<vmem>>, vector<8x16xf32>
    %cst_5 = arith.constant dense<0.000000e+00> : vector<8x128xf32>
    %95 = tpu.matmul %94, %93, %cst_5 {dimension_numbers = #tpu.dot_dimension_numbers<[1], [0], [0], [1], [0, 0, 1, 1], [], []>} : vector<8x16xf32>, vector<16x128xf32>, vector<8x128xf32> -> vector<8x128xf32>
    %c0_6 = arith.constant 0 : index
    %c0_7 = arith.constant 0 : index
    %96 = vector.load %arg4[%c0_6, %c0_7] : memref<8x128xf32, #tpu.memory_space<vmem>>, vector<8x128xf32>
    tpu.vector_store %arg4[%c0_6, %c0_7], %95 {strides = array<i32>} : memref<8x128xf32, #tpu.memory_space<vmem>>, vector<8x128xf32>,
    return
  }
  func.func @transform_0(%arg0: i32) -> (i32, i32) {
    %c0_i32 = arith.constant 0 : i32
    %c0_i32_0 = arith.constant 0 : i32
    %c0_i32_1 = arith.constant 0 : i32
    return %c0_i32, %c0_i32_0 : i32, i32
  }
  func.func @transform_1(%arg0: i32) -> (i32, i32) {
    %c0_i32 = arith.constant 0 : i32
    %c0_i32_0 = arith.constant 0 : i32
    return %c0_i32, %arg0 : i32, i32
  }
  func.func @transform_2(%arg0: i32) -> (i32, i32) {
    %c0_i32 = arith.constant 0 : i32
    %c0_i32_0 = arith.constant 0 : i32
    %c0_i32_1 = arith.constant 0 : i32
    return %c0_i32, %c0_i32_0 : i32, i32
  }
  func.func @transform_3(%arg0: i32) -> (i32, i32) {
    %c0_i32 = arith.constant 0 : i32
    %c0_i32_0 = arith.constant 0 : i32
    return %c0_i32, %arg0 : i32, i32
  }
}

</mosaic_0001>

<llo_original>
// kernel: extended_general_learnable_formula.1
$region0: #{extended_general_learnable_formula.1}
  #allocation0 [shape = 'u32[]', space=smem, size = 0x4, offset = 0x4, fixed_abs, tag = 'smem constant byte address 0x4 - core index']
  #allocation1 [shape = 'u32[72,128]{1,0:T(1,128)}', space=vmem, size = 0x9000, scoped, tag = 'internal scratch']
  %s0 = inlined_call_operand.vmem [shape: f32[192,64], index: 0, kind: input, shape index: {}]
  %s1 = inlined_call_operand.vmem [shape: f32[64,128], index: 1, kind: input, shape index: {}]
  %s2 = inlined_call_operand.vmem [shape: f32[8,16], index: 2, kind: input, shape index: {}]
  %s3 = inlined_call_operand.vmem [shape: f32[8,128], index: 3, kind: output, shape index: {}]
  %s4 = sld [smem:[#allocation0]]
  $region22: #{extended_general_learnable_formula.1} parent=0
    _
  %s6 = ssub.s32 1, %s4
  %s7 = scalar_select 0, %s6, %s4
  // Predicated region
  $region2: #{extended_general_learnable_formula.1} parent=0 // pred_check
    _
  $region3: #{extended_general_learnable_formula.1} parent=0 // pred_check_branch
    %9 = sbr.rel (0) target = $region5
  $region4: #{extended_general_learnable_formula.1} parent=0 // pred_region
    _
  $region5: #{extended_general_learnable_formula.1} parent=0 // pred_fallthru
    _
  // Predicated region
  $region6: #{extended_general_learnable_formula.1} parent=0 // pred_check
    _
  $region7: #{extended_general_learnable_formula.1} parent=0 // pred_check_branch
    %11 = sbr.rel (0) target = $region9
  $region8: #{extended_general_learnable_formula.1} parent=0 // pred_region
    _
  $region9: #{extended_general_learnable_formula.1} parent=0 // pred_fallthru
    _
  // Predicated region
  $region10: #{extended_general_learnable_formula.1} parent=0 // pred_check
    _
  $region11: #{extended_general_learnable_formula.1} parent=0 // pred_check_branch
    %13 = sbr.rel (0) target = $region13
  $region12: #{extended_general_learnable_formula.1} parent=0 // pred_region
    _
  $region13: #{extended_general_learnable_formula.1} parent=0 // pred_fallthru
    _
  %v14 = vld [vmem:[%s0] sm:$0xff]
  %v15 = vld [vmem:[%s0 + $0x8] sm:$0xff]
  %v16 = vld [vmem:[%s0 + $0x10] sm:$0xff]
  %v17 = vld [vmem:[%s0 + $0x18] sm:$0xff]
  %v18 = vld [vmem:[%s0 + $0x20] sm:$0xff]
  %v19 = vld [vmem:[%s0 + $0x28] sm:$0xff]
  %v20 = vld [vmem:[%s0 + $0x30] sm:$0xff]
  %v21 = vld [vmem:[%s0 + $0x38] sm:$0xff]
  %v22 = vld [vmem:[%s0 + $0x40] sm:$0xff]
  %v23 = vld [vmem:[%s0 + $0x48] sm:$0xff]
  %v24 = vld [vmem:[%s0 + $0x50] sm:$0xff]
  %v25 = vld [vmem:[%s0 + $0x58] sm:$0xff]
  %v26 = vld [vmem:[%s0 + $0x60] sm:$0xff]
  %v27 = vld [vmem:[%s0 + $0x68] sm:$0xff]
  %v28 = vld [vmem:[%s0 + $0x70] sm:$0xff]
  %v29 = vld [vmem:[%s0 + $0x78] sm:$0xff]
  %v30 = vld [vmem:[%s0 + $0x80] sm:$0xff]
  %v31 = vld [vmem:[%s0 + $0x88] sm:$0xff]
  %v32 = vld [vmem:[%s0 + $0x90] sm:$0xff]
  %v33 = vld [vmem:[%s0 + $0x98] sm:$0xff]
  %v34 = vld [vmem:[%s0 + $0xa0] sm:$0xff]
  %v35 = vld [vmem:[%s0 + $0xa8] sm:$0xff]
  %v36 = vld [vmem:[%s0 + $0xb0] sm:$0xff]
  %v37 = vld [vmem:[%s0 + $0xb8] sm:$0xff]
  %v38 = vld [vmem:[%s1] sm:$0xff]
  %v39 = vld [vmem:[%s1 + $0x8] sm:$0xff]
  %v40 = vld [vmem:[%s1 + $0x10] sm:$0xff]
  %v41 = vld [vmem:[%s1 + $0x18] sm:$0xff]
  %v42 = vld [vmem:[%s1 + $0x20] sm:$0xff]
  %v43 = vld [vmem:[%s1 + $0x28] sm:$0xff]
  %v44 = vld [vmem:[%s1 + $0x30] sm:$0xff]
  %v45 = vld [vmem:[%s1 + $0x38] sm:$0xff]
  %vm46 = vcmask 523264
  %v48 = vsel %vm46, %v14, 0
  %v51 = vsel %vm46, %v15, 0
  %v54 = vsel %vm46, %v16, 0
  %v57 = vsel %vm46, %v17, 0
  %v60 = vsel %vm46, %v18, 0
  %v63 = vsel %vm46, %v19, 0
  %v66 = vsel %vm46, %v20, 0
  %v69 = vsel %vm46, %v21, 0
  %v72 = vsel %vm46, %v22, 0
  %v75 = vsel %vm46, %v23, 0
  %v78 = vsel %vm46, %v24, 0
  %v81 = vsel %vm46, %v25, 0
  %v84 = vsel %vm46, %v26, 0
  %v87 = vsel %vm46, %v27, 0
  %v90 = vsel %vm46, %v28, 0
  %v93 = vsel %vm46, %v29, 0
  %v96 = vsel %vm46, %v30, 0
  %v99 = vsel %vm46, %v31, 0
  %v102 = vsel %vm46, %v32, 0
  %v105 = vsel %vm46, %v33, 0
  %v108 = vsel %vm46, %v34, 0
  %v111 = vsel %vm46, %v35, 0
  %v114 = vsel %vm46, %v36, 0
  %v117 = vsel %vm46, %v37, 0
  %119 = vmatpush.msra.mxu0 0.0
  %120 = vmatpush.msra.mxu0 0.0
  %121 = vmatpush.msra.mxu0 0.0
  %122 = vmatpush.msra.mxu0 0.0
  %123 = vmatpush.msra.mxu0 0.0
  %124 = vmatpush.msra.mxu0 0.0
  %125 = vmatpush.msra.mxu0 0.0
  %126 = vmatpush.msra.mxu0 0.0
  %127 = vmatpush.msra.mxu0 %v45
  %128 = vmatpush.msra.mxu0 %v44
  %129 = vmatpush.msra.mxu0 %v43
  %130 = vmatpush.msra.mxu0 %v42
  %131 = vmatpush.msra.mxu0 %v41
  %132 = vmatpush.msra.mxu0 %v40
  %133 = vmatpush.msra.mxu0 %v39
  %134 = vmatpush.msra.mxu0 %v38
  %135 = vmatmul.f32.gmra.mxu0 %v48
  %v136 = vpop.f32.mrf.mxu0
  %v137 = vadd.f32 0.0, %v136
  %138 = vmatmul.f32.gmra.mxu0 %v51
  %v139 = vpop.f32.mrf.mxu0
  %v140 = vadd.f32 0.0, %v139
  %141 = vmatmul.f32.gmra.mxu0 %v54
  %v142 = vpop.f32.mrf.mxu0
  %v143 = vadd.f32 0.0, %v142
  %144 = vmatmul.f32.gmra.mxu0 %v57
  %v145 = vpop.f32.mrf.mxu0
  %v146 = vadd.f32 0.0, %v145
  %147 = vmatmul.f32.gmra.mxu0 %v60
  %v148 = vpop.f32.mrf.mxu0
  %v149 = vadd.f32 0.0, %v148
  %150 = vmatmul.f32.gmra.mxu0 %v63
  %v151 = vpop.f32.mrf.mxu0
  %v152 = vadd.f32 0.0, %v151
  %153 = vmatmul.f32.gmra.mxu0 %v66
  %v154 = vpop.f32.mrf.mxu0
  %v155 = vadd.f32 0.0, %v154
  %156 = vmatmul.f32.gmra.mxu0 %v69
  %v157 = vpop.f32.mrf.mxu0
  %v158 = vadd.f32 0.0, %v157
  %159 = vmatmul.f32.gmra.mxu0 %v72
  %v160 = vpop.f32.mrf.mxu0
  %v161 = vadd.f32 0.0, %v160
  %162 = vmatmul.f32.gmra.mxu0 %v75
  %v163 = vpop.f32.mrf.mxu0
  %v164 = vadd.f32 0.0, %v163
  %165 = vmatmul.f32.gmra.mxu0 %v78
  %v166 = vpop.f32.mrf.mxu0
  %v167 = vadd.f32 0.0, %v166
  %168 = vmatmul.f32.gmra.mxu0 %v81
  %v169 = vpop.f32.mrf.mxu0
  %v170 = vadd.f32 0.0, %v169
  %171 = vmatmul.f32.gmra.mxu0 %v84
  %v172 = vpop.f32.mrf.mxu0
  %v173 = vadd.f32 0.0, %v172
  %174 = vmatmul.f32.gmra.mxu0 %v87
  %v175 = vpop.f32.mrf.mxu0
  %v176 = vadd.f32 0.0, %v175
  %177 = vmatmul.f32.gmra.mxu0 %v90
  %v178 = vpop.f32.mrf.mxu0
  %v179 = vadd.f32 0.0, %v178
  %180 = vmatmul.f32.gmra.mxu0 %v93
  %v181 = vpop.f32.mrf.mxu0
  %v182 = vadd.f32 0.0, %v181
  %183 = vmatmul.f32.gmra.mxu0 %v96
  %v184 = vpop.f32.mrf.mxu0
  %v185 = vadd.f32 0.0, %v184
  %186 = vmatmul.f32.gmra.mxu0 %v99
  %v187 = vpop.f32.mrf.mxu0
  %v188 = vadd.f32 0.0, %v187
  %189 = vmatmul.f32.gmra.mxu0 %v102
  %v190 = vpop.f32.mrf.mxu0
  %v191 = vadd.f32 0.0, %v190
  %192 = vmatmul.f32.gmra.mxu0 %v105
  %v193 = vpop.f32.mrf.mxu0
  %v194 = vadd.f32 0.0, %v193
  %195 = vmatmul.f32.gmra.mxu0 %v108
  %v196 = vpop.f32.mrf.mxu0
  %v197 = vadd.f32 0.0, %v196
  %198 = vmatmul.f32.gmra.mxu0 %v111
  %v199 = vpop.f32.mrf.mxu0
  %v200 = vadd.f32 0.0, %v199
  %201 = vmatmul.f32.gmra.mxu0 %v114
  %v202 = vpop.f32.mrf.mxu0
  %v203 = vadd.f32 0.0, %v202
  %204 = vmatmul.f32.gmra.mxu0 %v117
  %v205 = vpop.f32.mrf.mxu0
  %v206 = vadd.f32 0.0, %v205
  %207 = vdwg.mxu0
  %v208 = vmul.f32 %v137, %v143
  %v209 = vmul.f32 %v140, %v146
  %v210 = vsub.f32 %v208, %v209
  %v211 = vmul.f32 %v137, %v146
  %v212 = vmul.f32 %v140, %v143
  %v213 = vadd.f32 %v211, %v212
  %v214 = vmul.f32 %v210, %v149
  %v215 = vmul.f32 %v213, %v152
  %v216 = vsub.f32 %v214, %v215
  %v217 = vmul.f32 %v210, %v152
  %v218 = vmul.f32 %v213, %v149
  %v219 = vadd.f32 %v217, %v218
  %v220 = vmul.f32 %v216, %v155
  %v221 = vmul.f32 %v219, %v158
  %v222 = vsub.f32 %v220, %v221
  %v223 = vmul.f32 %v216, %v158
  %v224 = vmul.f32 %v219, %v155
  %v225 = vadd.f32 %v223, %v224
  %v226 = vmul.f32 %v222, %v161
  %v227 = vmul.f32 %v225, %v164
  %v228 = vsub.f32 %v226, %v227
  %v229 = vmul.f32 %v222, %v164
  %v230 = vmul.f32 %v225, %v161
  %v231 = vadd.f32 %v229, %v230
  %v232 = vmul.f32 %v228, %v167
  %v233 = vmul.f32 %v231, %v170
  %v234 = vsub.f32 %v232, %v233
  %v235 = vmul.f32 %v228, %v170
  %v236 = vmul.f32 %v231, %v167
  %v237 = vadd.f32 %v235, %v236
  %v238 = vmul.f32 %v173, %v179
  %v239 = vmul.f32 %v176, %v182
  %v240 = vsub.f32 %v238, %v239
  %v241 = vmul.f32 %v173, %v182
  %v242 = vmul.f32 %v176, %v179
  %v243 = vadd.f32 %v241, %v242
  %v244 = vmul.f32 %v240, %v185
  %v245 = vmul.f32 %v243, %v188
  %v246 = vsub.f32 %v244, %v245
  %v247 = vmul.f32 %v240, %v188
  %v248 = vmul.f32 %v243, %v185
  %v249 = vadd.f32 %v247, %v248
  %v250 = vmul.f32 %v246, %v191
  %v251 = vmul.f32 %v249, %v194
  %v252 = vsub.f32 %v250, %v251
  %v253 = vmul.f32 %v246, %v194
  %v254 = vmul.f32 %v249, %v191
  %v255 = vadd.f32 %v253, %v254
  %v256 = vmul.f32 %v252, %v197
  %v257 = vmul.f32 %v255, %v200
  %v258 = vsub.f32 %v256, %v257
  %v259 = vmul.f32 %v252, %v200
  %v260 = vmul.f32 %v255, %v197
  %v261 = vadd.f32 %v259, %v260
  %v262 = vmul.f32 %v258, %v203
  %v263 = vmul.f32 %v261, %v206
  %v264 = vsub.f32 %v262, %v263
  %v265 = vmul.f32 %v258, %v206
  %v266 = vmul.f32 %v261, %v203
  %v267 = vadd.f32 %v265, %v266
  %v268 = vmul.f32 %v234, %v264
  %v269 = vmul.f32 %v237, %v267
  %v270 = vadd.f32 %v268, %v269
  %v271 = vmul.f32 %v237, %v264
  %v272 = vmul.f32 %v234, %v267
  %v273 = vsub.f32 %v271, %v272
  %v274 = vld [vmem:[%s2] sm:$0xff]
  %vm275 = vcmask 130048
  %v277 = vsel %vm275, %v274, 0
  %279 = vmatpush.msra.mxu0 0.0
  %280 = vmatpush.msra.mxu0 0.0
  %281 = vmatpush.msra.mxu0 0.0
  %282 = vmatpush.msra.mxu0 0.0
  %283 = vmatpush.msra.mxu0 0.0
  %284 = vmatpush.msra.mxu0 0.0
  %285 = vmatpush.msra.mxu0 0.0
  %286 = vmatpush.msra.mxu0 0.0
  %287 = vmatpush.msra.mxu0 0.0
  %288 = vmatpush.msra.mxu0 0.0
  %289 = vmatpush.msra.mxu0 0.0
  %290 = vmatpush.msra.mxu0 0.0
  %291 = vmatpush.msra.mxu0 0.0
  %292 = vmatpush.msra.mxu0 0.0
  %293 = vmatpush.msra.mxu0 %v273
  %294 = vmatpush.msra.mxu0 %v270
  %295 = vmatmul.f32.gmra.mxu0 %v277
  %v296 = vpop.f32.mrf.mxu0
  %v297 = vadd.f32 0.0, %v296
  %298 = vdwg.mxu0
  %299 = vst [vmem:[%s3] sm:$0xff] %v297
  // Predicated region
  $region14: #{extended_general_learnable_formula.1} parent=0 // pred_check
    _
  $region15: #{extended_general_learnable_formula.1} parent=0 // pred_check_branch
    %301 = sbr.rel (0) target = $region17
  $region16: #{extended_general_learnable_formula.1} parent=0 // pred_region
    _
  $region17: #{extended_general_learnable_formula.1} parent=0 // pred_fallthru
    _
  // Predicated region
  $region18: #{extended_general_learnable_formula.1} parent=0 // pred_check
    _
  $region19: #{extended_general_learnable_formula.1} parent=0 // pred_check_branch
    %303 = sbr.rel (0) target = $region21
  $region20: #{extended_general_learnable_formula.1} parent=0 // pred_region
    _
  $region21: #{extended_general_learnable_formula.1} parent=0 // pred_fallthru
    _

</llo_original>
